<compile_context>
chip_gen: v6e
topology: v6e:2x2x1
jax: 0.10.0
libtpu: 0.0.40
codegen_flags: <defaults>
</compile_context>

<pallas_src>
import functools

import jax
import jax.numpy as jnp
from jax import lax
from jax.experimental import pallas as pl
from jax.experimental.pallas import tpu as pltpu


def lorenz_euler_kernel(params_ref, init_ref, out_ref, *, num_steps, dt, unroll=16):
    """Runs `num_steps` explicit-Euler steps of the Lorenz ODE.

    params_ref : SMEM f32[3]                 -> (sigma, rho, beta)
    init_ref   : SMEM f32[3]                 -> initial (x, y, z)  (== `stats`)
    out_ref    : SMEM f32[3*(num_steps+1)]   -> flat trajectory incl. init state
                 (state s lives at out_ref[3*s : 3*s+3])
    """
    sigma = params_ref[0]
    rho = params_ref[1]
    beta = params_ref[2]

    x0 = init_ref[0]
    y0 = init_ref[1]
    z0 = init_ref[2]

    # Hoisted loop constants (short serial dependence chain per step).
    sigma_dt = sigma * dt          # dt * sigma
    a = 1.0 - sigma_dt             # x-coefficient:  x1 = a*x + sigma_dt*y
    c = 1.0 - dt                   # y-coefficient:  y1 = c*y + dt*x*(rho - z)
    e = 1.0 - beta * dt            # z-coefficient:  z1 = e*z + dt*x*y

    # data_lorenz[0.0] = stats.clone()
    out_ref[0] = x0
    out_ref[1] = y0
    out_ref[2] = z0

    def euler_step(x, y, z):
        # Algebraically identical to:
        #   x + dt*sigma*(y - x),  y + dt*(x*(rho - z) - y),  z + dt*(x*y - beta*z)
        # but with a ~3-deep (vs ~5-deep) serial FP chain; the independent
        # products (x_dt, a*x, c*y, e*z) issue in parallel on the scalar slots.
        x_dt = dt * x
        x1 = a * x + sigma_dt * y
        y1 = c * y + x_dt * (rho - z)
        z1 = e * z + x_dt * y
        return x1, y1, z1

    num_main = num_steps // unroll
    rem = num_steps - num_main * unroll

    def body(j, carry):
        x, y, z = carry
        # State after step s = j*unroll + u is written at flat offset 3*(s+1).
        base = j * (3 * unroll) + 3
        for u in range(unroll):              # hand-unrolled: static u
            x, y, z = euler_step(x, y, z)
            off = base + 3 * u
            out_ref[off + 0] = x
            out_ref[off + 1] = y
            out_ref[off + 2] = z
        return (x, y, z)

    x, y, z = lax.fori_loop(0, num_main, body, (x0, y0, z0))

    # Static remainder (num_steps % unroll), unrolled at trace time.
    for r in range(rem):
        x, y, z = euler_step(x, y, z)
        off = 3 * (num_main * unroll + r + 1)
        out_ref[off + 0] = x
        out_ref[off + 1] = y
        out_ref[off + 2] = z


def lorenz_forward(params, stats, num_steps, dt=0.01, unroll=16):
    """Pallas wrapper. Returns the trajectory as f32[num_steps + 1, 3]."""
    n_states = num_steps + 1
    kernel = functools.partial(
        lorenz_euler_kernel, num_steps=num_steps, dt=float(dt), unroll=unroll
    )
    flat = pl.pallas_call(
        kernel,
        out_shape=jax.ShapeDtypeStruct((3 * n_states,), jnp.float32),
        in_specs=[
            pl.BlockSpec(memory_space=pltpu.SMEM),  # (sigma, rho, beta)
            pl.BlockSpec(memory_space=pltpu.SMEM),  # initial stats
        ],
        out_specs=pl.BlockSpec(memory_space=pltpu.SMEM),
    )(params, stats)
    return flat.reshape(n_states, 3)


def lorenz_reference(params, stats, num_steps, dt=0.01):
    """Pure-JAX reference matching the PyTorch loop semantics (unfused form)."""
    sigma, rho, beta = params[0], params[1], params[2]

    def step(carry, _):
        x, y, z = carry
        dx = sigma * (y - x)
        dy = x * (rho - z) - y
        dz = x * y - beta * z
        nxt = (x + dx * dt, y + dy * dt, z + dz * dt)
        return nxt, jnp.stack(nxt)

    init = (stats[0], stats[1], stats[2])
    _, traj = lax.scan(step, init, None, length=num_steps)
    return jnp.concatenate([stats[None, :], traj], axis=0)


def lorenz_reference_fused(params, stats, num_steps, dt=0.01):
    """Pure-JAX reference with the SAME arithmetic ordering as the kernel."""
    sigma, rho, beta = params[0], params[1], params[2]
    sigma_dt = sigma * dt
    a = 1.0 - sigma_dt
    c = 1.0 - dt
    e = 1.0 - beta * dt

    def step(carry, _):
        x, y, z = carry
        x_dt = dt * x
        nxt = (a * x + sigma_dt * y, c * y + x_dt * (rho - z), e * z + x_dt * y)
        return nxt, jnp.stack(nxt)

    init = (stats[0], stats[1], stats[2])
    _, traj = lax.scan(step, init, None, length=num_steps)
    return jnp.concatenate([stats[None, :], traj], axis=0)


if __name__ == "__main__":
    dt = 0.01

    # Parameters / initial state exactly as in LorenzModel.__init__:
    # sigma = rho = beta = 1.0, stats = [1, 1, 1].
    params = jnp.array([1.0, 1.0, 1.0], dtype=jnp.float32)   # sigma, rho, beta
    stats = jnp.array([1.0, 1.0, 1.0], dtype=jnp.float32)    # nn.Parameter stats

    # --- Small correctness check (8 time points -> 7 Euler steps) -----------
    num_steps = 7
    traj = jax.block_until_ready(lorenz_forward(params, stats, num_steps, dt=dt))
    ref = lorenz_reference(params, stats, num_steps, dt=dt)
    assert traj.shape == (num_steps + 1, 3)
    assert jnp.allclose(traj, ref, atol=1e-5, rtol=1e-5)

    # --- Real problem size (t = arange(0, 40, 0.01) -> 3999 steps) ----------
    num_steps_full = 3999
    traj_full = jax.block_until_ready(
        lorenz_forward(params, stats, num_steps_full, dt=dt)
    )
    assert traj_full.shape == (num_steps_full + 1, 3)
    # (a) tight check against the identically-ordered fused reference,
    # (b) looser check against the unfused PyTorch-ordered reference
    #     (re-association difference only; dynamics are non-chaotic here).
    ref_full_fused = lorenz_reference_fused(params, stats, num_steps_full, dt=dt)
    ref_full = lorenz_reference(params, stats, num_steps_full, dt=dt)
    assert jnp.allclose(traj_full, ref_full_fused, atol=1e-4, rtol=1e-4)
    assert jnp.allclose(traj_full, ref_full, atol=2e-3, rtol=2e-3)

    # --- Perturbed initial state (deterministic, PRNGKey(0)) ----------------
    key = jax.random.PRNGKey(0)
    stats_p = stats + 0.01 * jax.random.normal(key, (3,), dtype=jnp.float32)
    traj_p = jax.block_until_ready(
        lorenz_forward(params, stats_p, num_steps_full, dt=dt)
    )
    ref_p = lorenz_reference_fused(params, stats_p, num_steps_full, dt=dt)
    assert jnp.allclose(traj_p, ref_p, atol=1e-4, rtol=1e-4)

    # --- Short chaotic-parameter check (sigma=10, rho=28, beta=8/3) ---------
    # Compared against the identically-ordered fused reference over a short
    # horizon (end-to-end closeness vs. the unfused ordering would diverge
    # under chaos over thousands of steps).
    chaos_params = jnp.array([10.0, 28.0, 8.0 / 3.0], dtype=jnp.float32)
    num_steps_chaos = 200
    traj_c = jax.block_until_ready(
        lorenz_forward(chaos_params, stats_p, num_steps_chaos, dt=dt)
    )
    ref_c = lorenz_reference_fused(chaos_params, stats_p, num_steps_chaos, dt=dt)
    assert jnp.allclose(traj_c, ref_c, atol=2e-2, rtol=2e-2)

    # TODO(synk): the PyTorch forward returns a dict keyed by i/100 (and prints
    # progress); the kernel returns the equivalent stacked trajectory array.
    print("KERNEL_OK")
</pallas_src>

<mosaic_0001>
module attributes {stable_mosaic.version = 11 : i64} {
  func.func @lorenz_euler_kernel(%arg0: memref<3xf32, #tpu.memory_space<smem>>, %arg1: memref<3xf32, #tpu.memory_space<smem>>, %arg2: memref<24xf32, #tpu.memory_space<smem>>) attributes {dimension_semantics = [], scalar_prefetch = 0 : i64, scratch_operands = 0 : i64, tpu.core_type = #tpu.core_type<tc>} {
    %c0 = arith.constant 0 : index
    %0 = memref.load %arg0[%c0] : memref<3xf32, #tpu.memory_space<smem>>
    %c1 = arith.constant 1 : index
    %1 = memref.load %arg0[%c1] : memref<3xf32, #tpu.memory_space<smem>>
    %c2 = arith.constant 2 : index
    %2 = memref.load %arg0[%c2] : memref<3xf32, #tpu.memory_space<smem>>
    %c0_0 = arith.constant 0 : index
    %3 = memref.load %arg1[%c0_0] : memref<3xf32, #tpu.memory_space<smem>>
    %c1_1 = arith.constant 1 : index
    %4 = memref.load %arg1[%c1_1] : memref<3xf32, #tpu.memory_space<smem>>
    %c2_2 = arith.constant 2 : index
    %5 = memref.load %arg1[%c2_2] : memref<3xf32, #tpu.memory_space<smem>>
    %cst = arith.constant 0.00999999977 : f32
    %6 = arith.mulf %0, %cst : f32
    %cst_3 = arith.constant 1.000000e+00 : f32
    %7 = arith.subf %cst_3, %6 : f32
    %cst_4 = arith.constant 0.00999999977 : f32
    %8 = arith.mulf %2, %cst_4 : f32
    %cst_5 = arith.constant 1.000000e+00 : f32
    %9 = arith.subf %cst_5, %8 : f32
    %c0_6 = arith.constant 0 : index
    %10 = memref.load %arg2[%c0_6] : memref<24xf32, #tpu.memory_space<smem>>
    memref.store %3, %arg2[%c0_6] : memref<24xf32, #tpu.memory_space<smem>>
    %c1_7 = arith.constant 1 : index
    %11 = memref.load %arg2[%c1_7] : memref<24xf32, #tpu.memory_space<smem>>
    memref.store %4, %arg2[%c1_7] : memref<24xf32, #tpu.memory_space<smem>>
    %c2_8 = arith.constant 2 : index
    %12 = memref.load %arg2[%c2_8] : memref<24xf32, #tpu.memory_space<smem>>
    memref.store %5, %arg2[%c2_8] : memref<24xf32, #tpu.memory_space<smem>>
    %c0_i32 = arith.constant 0 : i32
    %c0_i32_9 = arith.constant 0 : i32
    %13 = arith.addi %c0_i32, %c0_i32_9 : i32
    %c1_i32 = arith.constant 1 : i32
    %14:3 = scf.for %arg3 = %c0_i32 to %13 step %c1_i32 iter_args(%arg4 = %3, %arg5 = %4, %arg6 = %5) -> (f32, f32, f32)  : i32 {
      %c48_i32 = arith.constant 48 : i32
      %113 = arith.muli %arg3, %c48_i32 : i32
      %c3_i32 = arith.constant 3 : i32
      %114 = arith.addi %113, %c3_i32 : i32
      %cst_25 = arith.constant 0.00999999977 : f32
      %115 = arith.mulf %cst_25, %arg4 : f32
      %116 = arith.mulf %7, %arg4 : f32
      %117 = arith.mulf %6, %arg5 : f32
      %118 = arith.addf %116, %117 : f32
      %cst_26 = arith.constant 9.900000e-01 : f32
      %119 = arith.mulf %cst_26, %arg5 : f32
      %120 = arith.subf %1, %arg6 : f32
      %121 = arith.mulf %115, %120 : f32
      %122 = arith.addf %119, %121 : f32
      %123 = arith.mulf %9, %arg6 : f32
      %124 = arith.mulf %115, %arg5 : f32
      %125 = arith.addf %123, %124 : f32
      %c0_i32_27 = arith.constant 0 : i32
      %126 = arith.addi %114, %c0_i32_27 : i32
      %c0_i32_28 = arith.constant 0 : i32
      %127 = arith.addi %126, %c0_i32_28 : i32
      %128 = arith.index_cast %127 : i32 to index
      %129 = memref.load %arg2[%128] : memref<24xf32, #tpu.memory_space<smem>>
      memref.store %118, %arg2[%128] : memref<24xf32, #tpu.memory_space<smem>>
      %c1_i32_29 = arith.constant 1 : i32
      %130 = arith.addi %126, %c1_i32_29 : i32
      %131 = arith.index_cast %130 : i32 to index
      %132 = memref.load %arg2[%131] : memref<24xf32, #tpu.memory_space<smem>>
      memref.store %122, %arg2[%131] : memref<24xf32, #tpu.memory_space<smem>>
      %c2_i32 = arith.constant 2 : i32
      %133 = arith.addi %126, %c2_i32 : i32
      %134 = arith.index_cast %133 : i32 to index
      %135 = memref.load %arg2[%134] : memref<24xf32, #tpu.memory_space<smem>>
      memref.store %125, %arg2[%134] : memref<24xf32, #tpu.memory_space<smem>>
      %cst_30 = arith.constant 0.00999999977 : f32
      %136 = arith.mulf %cst_30, %118 : f32
      %137 = arith.mulf %7, %118 : f32
      %138 = arith.mulf %6, %122 : f32
      %139 = arith.addf %137, %138 : f32
      %cst_31 = arith.constant 9.900000e-01 : f32
      %140 = arith.mulf %cst_31, %122 : f32
      %141 = arith.subf %1, %125 : f32
      %142 = arith.mulf %136, %141 : f32
      %143 = arith.addf %140, %142 : f32
      %144 = arith.mulf %9, %125 : f32
      %145 = arith.mulf %136, %122 : f32
      %146 = arith.addf %144, %145 : f32
      %c3_i32_32 = arith.constant 3 : i32
      %147 = arith.addi %114, %c3_i32_32 : i32
      %c0_i32_33 = arith.constant 0 : i32
      %148 = arith.addi %147, %c0_i32_33 : i32
      %149 = arith.index_cast %148 : i32 to index
      %150 = memref.load %arg2[%149] : memref<24xf32, #tpu.memory_space<smem>>
      memref.store %139, %arg2[%149] : memref<24xf32, #tpu.memory_space<smem>>
      %c1_i32_34 = arith.constant 1 : i32
      %151 = arith.addi %147, %c1_i32_34 : i32
      %152 = arith.index_cast %151 : i32 to index
      %153 = memref.load %arg2[%152] : memref<24xf32, #tpu.memory_space<smem>>
      memref.store %143, %arg2[%152] : memref<24xf32, #tpu.memory_space<smem>>
      %c2_i32_35 = arith.constant 2 : i32
      %154 = arith.addi %147, %c2_i32_35 : i32
      %155 = arith.index_cast %154 : i32 to index
      %156 = memref.load %arg2[%155] : memref<24xf32, #tpu.memory_space<smem>>
      memref.store %146, %arg2[%155] : memref<24xf32, #tpu.memory_space<smem>>
      %cst_36 = arith.constant 0.00999999977 : f32
      %157 = arith.mulf %cst_36, %139 : f32
      %158 = arith.mulf %7, %139 : f32
      %159 = arith.mulf %6, %143 : f32
      %160 = arith.addf %158, %159 : f32
      %cst_37 = arith.constant 9.900000e-01 : f32
      %161 = arith.mulf %cst_37, %143 : f32
      %162 = arith.subf %1, %146 : f32
      %163 = arith.mulf %157, %162 : f32
      %164 = arith.addf %161, %163 : f32
      %165 = arith.mulf %9, %146 : f32
      %166 = arith.mulf %157, %143 : f32
      %167 = arith.addf %165, %166 : f32
      %c6_i32 = arith.constant 6 : i32
      %168 = arith.addi %114, %c6_i32 : i32
      %c0_i32_38 = arith.constant 0 : i32
      %169 = arith.addi %168, %c0_i32_38 : i32
      %170 = arith.index_cast %169 : i32 to index
      %171 = memref.load %arg2[%170] : memref<24xf32, #tpu.memory_space<smem>>
      memref.store %160, %arg2[%170] : memref<24xf32, #tpu.memory_space<smem>>
      %c1_i32_39 = arith.constant 1 : i32
      %172 = arith.addi %168, %c1_i32_39 : i32
      %173 = arith.index_cast %172 : i32 to index
      %174 = memref.load %arg2[%173] : memref<24xf32, #tpu.memory_space<smem>>
      memref.store %164, %arg2[%173] : memref<24xf32, #tpu.memory_space<smem>>
      %c2_i32_40 = arith.constant 2 : i32
      %175 = arith.addi %168, %c2_i32_40 : i32
      %176 = arith.index_cast %175 : i32 to index
      %177 = memref.load %arg2[%176] : memref<24xf32, #tpu.memory_space<smem>>
      memref.store %167, %arg2[%176] : memref<24xf32, #tpu.memory_space<smem>>
      %cst_41 = arith.constant 0.00999999977 : f32
      %178 = arith.mulf %cst_41, %160 : f32
      %179 = arith.mulf %7, %160 : f32
      %180 = arith.mulf %6, %164 : f32
      %181 = arith.addf %179, %180 : f32
      %cst_42 = arith.constant 9.900000e-01 : f32
      %182 = arith.mulf %cst_42, %164 : f32
      %183 = arith.subf %1, %167 : f32
      %184 = arith.mulf %178, %183 : f32
      %185 = arith.addf %182, %184 : f32
      %186 = arith.mulf %9, %167 : f32
      %187 = arith.mulf %178, %164 : f32
      %188 = arith.addf %186, %187 : f32
      %c9_i32 = arith.constant 9 : i32
      %189 = arith.addi %114, %c9_i32 : i32
      %c0_i32_43 = arith.constant 0 : i32
      %190 = arith.addi %189, %c0_i32_43 : i32
      %191 = arith.index_cast %190 : i32 to index
      %192 = memref.load %arg2[%191] : memref<24xf32, #tpu.memory_space<smem>>
      memref.store %181, %arg2[%191] : memref<24xf32, #tpu.memory_space<smem>>
      %c1_i32_44 = arith.constant 1 : i32
      %193 = arith.addi %189, %c1_i32_44 : i32
      %194 = arith.index_cast %193 : i32 to index
      %195 = memref.load %arg2[%194] : memref<24xf32, #tpu.memory_space<smem>>
      memref.store %185, %arg2[%194] : memref<24xf32, #tpu.memory_space<smem>>
      %c2_i32_45 = arith.constant 2 : i32
      %196 = arith.addi %189, %c2_i32_45 : i32
      %197 = arith.index_cast %196 : i32 to index
      %198 = memref.load %arg2[%197] : memref<24xf32, #tpu.memory_space<smem>>
      memref.store %188, %arg2[%197] : memref<24xf32, #tpu.memory_space<smem>>
      %cst_46 = arith.constant 0.00999999977 : f32
      %199 = arith.mulf %cst_46, %181 : f32
      %200 = arith.mulf %7, %181 : f32
      %201 = arith.mulf %6, %185 : f32
      %202 = arith.addf %200, %201 : f32
      %cst_47 = arith.constant 9.900000e-01 : f32
      %203 = arith.mulf %cst_47, %185 : f32
      %204 = arith.subf %1, %188 : f32
      %205 = arith.mulf %199, %204 : f32
      %206 = arith.addf %203, %205 : f32
      %207 = arith.mulf %9, %188 : f32
      %208 = arith.mulf %199, %185 : f32
      %209 = arith.addf %207, %208 : f32
      %c12_i32 = arith.constant 12 : i32
      %210 = arith.addi %114, %c12_i32 : i32
      %c0_i32_48 = arith.constant 0 : i32
      %211 = arith.addi %210, %c0_i32_48 : i32
      %212 = arith.index_cast %211 : i32 to index
      %213 = memref.load %arg2[%212] : memref<24xf32, #tpu.memory_space<smem>>
      memref.store %202, %arg2[%212] : memref<24xf32, #tpu.memory_space<smem>>
      %c1_i32_49 = arith.constant 1 : i32
      %214 = arith.addi %210, %c1_i32_49 : i32
      %215 = arith.index_cast %214 : i32 to index
      %216 = memref.load %arg2[%215] : memref<24xf32, #tpu.memory_space<smem>>
      memref.store %206, %arg2[%215] : memref<24xf32, #tpu.memory_space<smem>>
      %c2_i32_50 = arith.constant 2 : i32
      %217 = arith.addi %210, %c2_i32_50 : i32
      %218 = arith.index_cast %217 : i32 to index
      %219 = memref.load %arg2[%218] : memref<24xf32, #tpu.memory_space<smem>>
      memref.store %209, %arg2[%218] : memref<24xf32, #tpu.memory_space<smem>>
      %cst_51 = arith.constant 0.00999999977 : f32
      %220 = arith.mulf %cst_51, %202 : f32
      %221 = arith.mulf %7, %202 : f32
      %222 = arith.mulf %6, %206 : f32
      %223 = arith.addf %221, %222 : f32
      %cst_52 = arith.constant 9.900000e-01 : f32
      %224 = arith.mulf %cst_52, %206 : f32
      %225 = arith.subf %1, %209 : f32
      %226 = arith.mulf %220, %225 : f32
      %227 = arith.addf %224, %226 : f32
      %228 = arith.mulf %9, %209 : f32
      %229 = arith.mulf %220, %206 : f32
      %230 = arith.addf %228, %229 : f32
      %c15_i32 = arith.constant 15 : i32
      %231 = arith.addi %114, %c15_i32 : i32
      %c0_i32_53 = arith.constant 0 : i32
      %232 = arith.addi %231, %c0_i32_53 : i32
      %233 = arith.index_cast %232 : i32 to index
      %234 = memref.load %arg2[%233] : memref<24xf32, #tpu.memory_space<smem>>
      memref.store %223, %arg2[%233] : memref<24xf32, #tpu.memory_space<smem>>
      %c1_i32_54 = arith.constant 1 : i32
      %235 = arith.addi %231, %c1_i32_54 : i32
      %236 = arith.index_cast %235 : i32 to index
      %237 = memref.load %arg2[%236] : memref<24xf32, #tpu.memory_space<smem>>
      memref.store %227, %arg2[%236] : memref<24xf32, #tpu.memory_space<smem>>
      %c2_i32_55 = arith.constant 2 : i32
      %238 = arith.addi %231, %c2_i32_55 : i32
      %239 = arith.index_cast %238 : i32 to index
      %240 = memref.load %arg2[%239] : memref<24xf32, #tpu.memory_space<smem>>
      memref.store %230, %arg2[%239] : memref<24xf32, #tpu.memory_space<smem>>
      %cst_56 = arith.constant 0.00999999977 : f32
      %241 = arith.mulf %cst_56, %223 : f32
      %242 = arith.mulf %7, %223 : f32
      %243 = arith.mulf %6, %227 : f32
      %244 = arith.addf %242, %243 : f32
      %cst_57 = arith.constant 9.900000e-01 : f32
      %245 = arith.mulf %cst_57, %227 : f32
      %246 = arith.subf %1, %230 : f32
      %247 = arith.mulf %241, %246 : f32
      %248 = arith.addf %245, %247 : f32
      %249 = arith.mulf %9, %230 : f32
      %250 = arith.mulf %241, %227 : f32
      %251 = arith.addf %249, %250 : f32
      %c18_i32 = arith.constant 18 : i32
      %252 = arith.addi %114, %c18_i32 : i32
      %c0_i32_58 = arith.constant 0 : i32
      %253 = arith.addi %252, %c0_i32_58 : i32
      %254 = arith.index_cast %253 : i32 to index
      %255 = memref.load %arg2[%254] : memref<24xf32, #tpu.memory_space<smem>>
      memref.store %244, %arg2[%254] : memref<24xf32, #tpu.memory_space<smem>>
      %c1_i32_59 = arith.constant 1 : i32
      %256 = arith.addi %252, %c1_i32_59 : i32
      %257 = arith.index_cast %256 : i32 to index
      %258 = memref.load %arg2[%257] : memref<24xf32, #tpu.memory_space<smem>>
      memref.store %248, %arg2[%257] : memref<24xf32, #tpu.memory_space<smem>>
      %c2_i32_60 = arith.constant 2 : i32
      %259 = arith.addi %252, %c2_i32_60 : i32
      %260 = arith.index_cast %259 : i32 to index
      %261 = memref.load %arg2[%260] : memref<24xf32, #tpu.memory_space<smem>>
      memref.store %251, %arg2[%260] : memref<24xf32, #tpu.memory_space<smem>>
      %cst_61 = arith.constant 0.00999999977 : f32
      %262 = arith.mulf %cst_61, %244 : f32
      %263 = arith.mulf %7, %244 : f32
      %264 = arith.mulf %6, %248 : f32
      %265 = arith.addf %263, %264 : f32
      %cst_62 = arith.constant 9.900000e-01 : f32
      %266 = arith.mulf %cst_62, %248 : f32
      %267 = arith.subf %1, %251 : f32
      %268 = arith.mulf %262, %267 : f32
      %269 = arith.addf %266, %268 : f32
      %270 = arith.mulf %9, %251 : f32
      %271 = arith.mulf %262, %248 : f32
      %272 = arith.addf %270, %271 : f32
      %c21_i32 = arith.constant 21 : i32
      %273 = arith.addi %114, %c21_i32 : i32
      %c0_i32_63 = arith.constant 0 : i32
      %274 = arith.addi %273, %c0_i32_63 : i32
      %275 = arith.index_cast %274 : i32 to index
      %276 = memref.load %arg2[%275] : memref<24xf32, #tpu.memory_space<smem>>
      memref.store %265, %arg2[%275] : memref<24xf32, #tpu.memory_space<smem>>
      %c1_i32_64 = arith.constant 1 : i32
      %277 = arith.addi %273, %c1_i32_64 : i32
      %278 = arith.index_cast %277 : i32 to index
      %279 = memref.load %arg2[%278] : memref<24xf32, #tpu.memory_space<smem>>
      memref.store %269, %arg2[%278] : memref<24xf32, #tpu.memory_space<smem>>
      %c2_i32_65 = arith.constant 2 : i32
      %280 = arith.addi %273, %c2_i32_65 : i32
      %281 = arith.index_cast %280 : i32 to index
      %282 = memref.load %arg2[%281] : memref<24xf32, #tpu.memory_space<smem>>
      memref.store %272, %arg2[%281] : memref<24xf32, #tpu.memory_space<smem>>
      %cst_66 = arith.constant 0.00999999977 : f32
      %283 = arith.mulf %cst_66, %265 : f32
      %284 = arith.mulf %7, %265 : f32
      %285 = arith.mulf %6, %269 : f32
      %286 = arith.addf %284, %285 : f32
      %cst_67 = arith.constant 9.900000e-01 : f32
      %287 = arith.mulf %cst_67, %269 : f32
      %288 = arith.subf %1, %272 : f32
      %289 = arith.mulf %283, %288 : f32
      %290 = arith.addf %287, %289 : f32
      %291 = arith.mulf %9, %272 : f32
      %292 = arith.mulf %283, %269 : f32
      %293 = arith.addf %291, %292 : f32
      %c24_i32 = arith.constant 24 : i32
      %294 = arith.addi %114, %c24_i32 : i32
      %c0_i32_68 = arith.constant 0 : i32
      %295 = arith.addi %294, %c0_i32_68 : i32
      %296 = arith.index_cast %295 : i32 to index
      %297 = memref.load %arg2[%296] : memref<24xf32, #tpu.memory_space<smem>>
      memref.store %286, %arg2[%296] : memref<24xf32, #tpu.memory_space<smem>>
      %c1_i32_69 = arith.constant 1 : i32
      %298 = arith.addi %294, %c1_i32_69 : i32
      %299 = arith.index_cast %298 : i32 to index
      %300 = memref.load %arg2[%299] : memref<24xf32, #tpu.memory_space<smem>>
      memref.store %290, %arg2[%299] : memref<24xf32, #tpu.memory_space<smem>>
      %c2_i32_70 = arith.constant 2 : i32
      %301 = arith.addi %294, %c2_i32_70 : i32
      %302 = arith.index_cast %301 : i32 to index
      %303 = memref.load %arg2[%302] : memref<24xf32, #tpu.memory_space<smem>>
      memref.store %293, %arg2[%302] : memref<24xf32, #tpu.memory_space<smem>>
      %cst_71 = arith.constant 0.00999999977 : f32
      %304 = arith.mulf %cst_71, %286 : f32
      %305 = arith.mulf %7, %286 : f32
      %306 = arith.mulf %6, %290 : f32
      %307 = arith.addf %305, %306 : f32
      %cst_72 = arith.constant 9.900000e-01 : f32
      %308 = arith.mulf %cst_72, %290 : f32
      %309 = arith.subf %1, %293 : f32
      %310 = arith.mulf %304, %309 : f32
      %311 = arith.addf %308, %310 : f32
      %312 = arith.mulf %9, %293 : f32
      %313 = arith.mulf %304, %290 : f32
      %314 = arith.addf %312, %313 : f32
      %c27_i32 = arith.constant 27 : i32
      %315 = arith.addi %114, %c27_i32 : i32
      %c0_i32_73 = arith.constant 0 : i32
      %316 = arith.addi %315, %c0_i32_73 : i32
      %317 = arith.index_cast %316 : i32 to index
      %318 = memref.load %arg2[%317] : memref<24xf32, #tpu.memory_space<smem>>
      memref.store %307, %arg2[%317] : memref<24xf32, #tpu.memory_space<smem>>
      %c1_i32_74 = arith.constant 1 : i32
      %319 = arith.addi %315, %c1_i32_74 : i32
      %320 = arith.index_cast %319 : i32 to index
      %321 = memref.load %arg2[%320] : memref<24xf32, #tpu.memory_space<smem>>
      memref.store %311, %arg2[%320] : memref<24xf32, #tpu.memory_space<smem>>
      %c2_i32_75 = arith.constant 2 : i32
      %322 = arith.addi %315, %c2_i32_75 : i32
      %323 = arith.index_cast %322 : i32 to index
      %324 = memref.load %arg2[%323] : memref<24xf32, #tpu.memory_space<smem>>
      memref.store %314, %arg2[%323] : memref<24xf32, #tpu.memory_space<smem>>
      %cst_76 = arith.constant 0.00999999977 : f32
      %325 = arith.mulf %cst_76, %307 : f32
      %326 = arith.mulf %7, %307 : f32
      %327 = arith.mulf %6, %311 : f32
      %328 = arith.addf %326, %327 : f32
      %cst_77 = arith.constant 9.900000e-01 : f32
      %329 = arith.mulf %cst_77, %311 : f32
      %330 = arith.subf %1, %314 : f32
      %331 = arith.mulf %325, %330 : f32
      %332 = arith.addf %329, %331 : f32
      %333 = arith.mulf %9, %314 : f32
      %334 = arith.mulf %325, %311 : f32
      %335 = arith.addf %333, %334 : f32
      %c30_i32 = arith.constant 30 : i32
      %336 = arith.addi %114, %c30_i32 : i32
      %c0_i32_78 = arith.constant 0 : i32
      %337 = arith.addi %336, %c0_i32_78 : i32
      %338 = arith.index_cast %337 : i32 to index
      %339 = memref.load %arg2[%338] : memref<24xf32, #tpu.memory_space<smem>>
      memref.store %328, %arg2[%338] : memref<24xf32, #tpu.memory_space<smem>>
      %c1_i32_79 = arith.constant 1 : i32
      %340 = arith.addi %336, %c1_i32_79 : i32
      %341 = arith.index_cast %340 : i32 to index
      %342 = memref.load %arg2[%341] : memref<24xf32, #tpu.memory_space<smem>>
      memref.store %332, %arg2[%341] : memref<24xf32, #tpu.memory_space<smem>>
      %c2_i32_80 = arith.constant 2 : i32
      %343 = arith.addi %336, %c2_i32_80 : i32
      %344 = arith.index_cast %343 : i32 to index
      %345 = memref.load %arg2[%344] : memref<24xf32, #tpu.memory_space<smem>>
      memref.store %335, %arg2[%344] : memref<24xf32, #tpu.memory_space<smem>>
      %cst_81 = arith.constant 0.00999999977 : f32
      %346 = arith.mulf %cst_81, %328 : f32
      %347 = arith.mulf %7, %328 : f32
      %348 = arith.mulf %6, %332 : f32
      %349 = arith.addf %347, %348 : f32
      %cst_82 = arith.constant 9.900000e-01 : f32
      %350 = arith.mulf %cst_82, %332 : f32
      %351 = arith.subf %1, %335 : f32
      %352 = arith.mulf %346, %351 : f32
      %353 = arith.addf %350, %352 : f32
      %354 = arith.mulf %9, %335 : f32
      %355 = arith.mulf %346, %332 : f32
      %356 = arith.addf %354, %355 : f32
      %c33_i32 = arith.constant 33 : i32
      %357 = arith.addi %114, %c33_i32 : i32
      %c0_i32_83 = arith.constant 0 : i32
      %358 = arith.addi %357, %c0_i32_83 : i32
      %359 = arith.index_cast %358 : i32 to index
      %360 = memref.load %arg2[%359] : memref<24xf32, #tpu.memory_space<smem>>
      memref.store %349, %arg2[%359] : memref<24xf32, #tpu.memory_space<smem>>
      %c1_i32_84 = arith.constant 1 : i32
      %361 = arith.addi %357, %c1_i32_84 : i32
      %362 = arith.index_cast %361 : i32 to index
      %363 = memref.load %arg2[%362] : memref<24xf32, #tpu.memory_space<smem>>
      memref.store %353, %arg2[%362] : memref<24xf32, #tpu.memory_space<smem>>
      %c2_i32_85 = arith.constant 2 : i32
      %364 = arith.addi %357, %c2_i32_85 : i32
      %365 = arith.index_cast %364 : i32 to index
      %366 = memref.load %arg2[%365] : memref<24xf32, #tpu.memory_space<smem>>
      memref.store %356, %arg2[%365] : memref<24xf32, #tpu.memory_space<smem>>
      %cst_86 = arith.constant 0.00999999977 : f32
      %367 = arith.mulf %cst_86, %349 : f32
      %368 = arith.mulf %7, %349 : f32
      %369 = arith.mulf %6, %353 : f32
      %370 = arith.addf %368, %369 : f32
      %cst_87 = arith.constant 9.900000e-01 : f32
      %371 = arith.mulf %cst_87, %353 : f32
      %372 = arith.subf %1, %356 : f32
      %373 = arith.mulf %367, %372 : f32
      %374 = arith.addf %371, %373 : f32
      %375 = arith.mulf %9, %356 : f32
      %376 = arith.mulf %367, %353 : f32
      %377 = arith.addf %375, %376 : f32
      %c36_i32 = arith.constant 36 : i32
      %378 = arith.addi %114, %c36_i32 : i32
      %c0_i32_88 = arith.constant 0 : i32
      %379 = arith.addi %378, %c0_i32_88 : i32
      %380 = arith.index_cast %379 : i32 to index
      %381 = memref.load %arg2[%380] : memref<24xf32, #tpu.memory_space<smem>>
      memref.store %370, %arg2[%380] : memref<24xf32, #tpu.memory_space<smem>>
      %c1_i32_89 = arith.constant 1 : i32
      %382 = arith.addi %378, %c1_i32_89 : i32
      %383 = arith.index_cast %382 : i32 to index
      %384 = memref.load %arg2[%383] : memref<24xf32, #tpu.memory_space<smem>>
      memref.store %374, %arg2[%383] : memref<24xf32, #tpu.memory_space<smem>>
      %c2_i32_90 = arith.constant 2 : i32
      %385 = arith.addi %378, %c2_i32_90 : i32
      %386 = arith.index_cast %385 : i32 to index
      %387 = memref.load %arg2[%386] : memref<24xf32, #tpu.memory_space<smem>>
      memref.store %377, %arg2[%386] : memref<24xf32, #tpu.memory_space<smem>>
      %cst_91 = arith.constant 0.00999999977 : f32
      %388 = arith.mulf %cst_91, %370 : f32
      %389 = arith.mulf %7, %370 : f32
      %390 = arith.mulf %6, %374 : f32
      %391 = arith.addf %389, %390 : f32
      %cst_92 = arith.constant 9.900000e-01 : f32
      %392 = arith.mulf %cst_92, %374 : f32
      %393 = arith.subf %1, %377 : f32
      %394 = arith.mulf %388, %393 : f32
      %395 = arith.addf %392, %394 : f32
      %396 = arith.mulf %9, %377 : f32
      %397 = arith.mulf %388, %374 : f32
      %398 = arith.addf %396, %397 : f32
      %c39_i32 = arith.constant 39 : i32
      %399 = arith.addi %114, %c39_i32 : i32
      %c0_i32_93 = arith.constant 0 : i32
      %400 = arith.addi %399, %c0_i32_93 : i32
      %401 = arith.index_cast %400 : i32 to index
      %402 = memref.load %arg2[%401] : memref<24xf32, #tpu.memory_space<smem>>
      memref.store %391, %arg2[%401] : memref<24xf32, #tpu.memory_space<smem>>
      %c1_i32_94 = arith.constant 1 : i32
      %403 = arith.addi %399, %c1_i32_94 : i32
      %404 = arith.index_cast %403 : i32 to index
      %405 = memref.load %arg2[%404] : memref<24xf32, #tpu.memory_space<smem>>
      memref.store %395, %arg2[%404] : memref<24xf32, #tpu.memory_space<smem>>
      %c2_i32_95 = arith.constant 2 : i32
      %406 = arith.addi %399, %c2_i32_95 : i32
      %407 = arith.index_cast %406 : i32 to index
      %408 = memref.load %arg2[%407] : memref<24xf32, #tpu.memory_space<smem>>
      memref.store %398, %arg2[%407] : memref<24xf32, #tpu.memory_space<smem>>
      %cst_96 = arith.constant 0.00999999977 : f32
      %409 = arith.mulf %cst_96, %391 : f32
      %410 = arith.mulf %7, %391 : f32
      %411 = arith.mulf %6, %395 : f32
      %412 = arith.addf %410, %411 : f32
      %cst_97 = arith.constant 9.900000e-01 : f32
      %413 = arith.mulf %cst_97, %395 : f32
      %414 = arith.subf %1, %398 : f32
      %415 = arith.mulf %409, %414 : f32
      %416 = arith.addf %413, %415 : f32
      %417 = arith.mulf %9, %398 : f32
      %418 = arith.mulf %409, %395 : f32
      %419 = arith.addf %417, %418 : f32
      %c42_i32 = arith.constant 42 : i32
      %420 = arith.addi %114, %c42_i32 : i32
      %c0_i32_98 = arith.constant 0 : i32
      %421 = arith.addi %420, %c0_i32_98 : i32
      %422 = arith.index_cast %421 : i32 to index
      %423 = memref.load %arg2[%422] : memref<24xf32, #tpu.memory_space<smem>>
      memref.store %412, %arg2[%422] : memref<24xf32, #tpu.memory_space<smem>>
      %c1_i32_99 = arith.constant 1 : i32
      %424 = arith.addi %420, %c1_i32_99 : i32
      %425 = arith.index_cast %424 : i32 to index
      %426 = memref.load %arg2[%425] : memref<24xf32, #tpu.memory_space<smem>>
      memref.store %416, %arg2[%425] : memref<24xf32, #tpu.memory_space<smem>>
      %c2_i32_100 = arith.constant 2 : i32
      %427 = arith.addi %420, %c2_i32_100 : i32
      %428 = arith.index_cast %427 : i32 to index
      %429 = memref.load %arg2[%428] : memref<24xf32, #tpu.memory_space<smem>>
      memref.store %419, %arg2[%428] : memref<24xf32, #tpu.memory_space<smem>>
      %cst_101 = arith.constant 0.00999999977 : f32
      %430 = arith.mulf %cst_101, %412 : f32
      %431 = arith.mulf %7, %412 : f32
      %432 = arith.mulf %6, %416 : f32
      %433 = arith.addf %431, %432 : f32
      %cst_102 = arith.constant 9.900000e-01 : f32
      %434 = arith.mulf %cst_102, %416 : f32
      %435 = arith.subf %1, %419 : f32
      %436 = arith.mulf %430, %435 : f32
      %437 = arith.addf %434, %436 : f32
      %438 = arith.mulf %9, %419 : f32
      %439 = arith.mulf %430, %416 : f32
      %440 = arith.addf %438, %439 : f32
      %c45_i32 = arith.constant 45 : i32
      %441 = arith.addi %114, %c45_i32 : i32
      %c0_i32_103 = arith.constant 0 : i32
      %442 = arith.addi %441, %c0_i32_103 : i32
      %443 = arith.index_cast %442 : i32 to index
      %444 = memref.load %arg2[%443] : memref<24xf32, #tpu.memory_space<smem>>
      memref.store %433, %arg2[%443] : memref<24xf32, #tpu.memory_space<smem>>
      %c1_i32_104 = arith.constant 1 : i32
      %445 = arith.addi %441, %c1_i32_104 : i32
      %446 = arith.index_cast %445 : i32 to index
      %447 = memref.load %arg2[%446] : memref<24xf32, #tpu.memory_space<smem>>
      memref.store %437, %arg2[%446] : memref<24xf32, #tpu.memory_space<smem>>
      %c2_i32_105 = arith.constant 2 : i32
      %448 = arith.addi %441, %c2_i32_105 : i32
      %449 = arith.index_cast %448 : i32 to index
      %450 = memref.load %arg2[%449] : memref<24xf32, #tpu.memory_space<smem>>
      memref.store %440, %arg2[%449] : memref<24xf32, #tpu.memory_space<smem>>
      scf.yield %433, %437, %440 : f32, f32, f32
    }
    %c0_i32_10 = arith.constant 0 : i32
    %cst_11 = arith.constant 0.00999999977 : f32
    %15 = arith.mulf %cst_11, %14#0 : f32
    %16 = arith.mulf %7, %14#0 : f32
    %17 = arith.mulf %6, %14#1 : f32
    %18 = arith.addf %16, %17 : f32
    %cst_12 = arith.constant 9.900000e-01 : f32
    %19 = arith.mulf %cst_12, %14#1 : f32
    %20 = arith.subf %1, %14#2 : f32
    %21 = arith.mulf %15, %20 : f32
    %22 = arith.addf %19, %21 : f32
    %23 = arith.mulf %9, %14#2 : f32
    %24 = arith.mulf %15, %14#1 : f32
    %25 = arith.addf %23, %24 : f32
    %c3 = arith.constant 3 : index
    %26 = memref.load %arg2[%c3] : memref<24xf32, #tpu.memory_space<smem>>
    memref.store %18, %arg2[%c3] : memref<24xf32, #tpu.memory_space<smem>>
    %c4 = arith.constant 4 : index
    %27 = memref.load %arg2[%c4] : memref<24xf32, #tpu.memory_space<smem>>
    memref.store %22, %arg2[%c4] : memref<24xf32, #tpu.memory_space<smem>>
    %c5 = arith.constant 5 : index
    %28 = memref.load %arg2[%c5] : memref<24xf32, #tpu.memory_space<smem>>
    memref.store %25, %arg2[%c5] : memref<24xf32, #tpu.memory_space<smem>>
    %cst_13 = arith.constant 0.00999999977 : f32
    %29 = arith.mulf %cst_13, %18 : f32
    %30 = arith.mulf %7, %18 : f32
    %31 = arith.mulf %6, %22 : f32
    %32 = arith.addf %30, %31 : f32
    %cst_14 = arith.constant 9.900000e-01 : f32
    %33 = arith.mulf %cst_14, %22 : f32
    %34 = arith.subf %1, %25 : f32
    %35 = arith.mulf %29, %34 : f32
    %36 = arith.addf %33, %35 : f32
    %37 = arith.mulf %9, %25 : f32
    %38 = arith.mulf %29, %22 : f32
    %39 = arith.addf %37, %38 : f32
    %c6 = arith.constant 6 : index
    %40 = memref.load %arg2[%c6] : memref<24xf32, #tpu.memory_space<smem>>
    memref.store %32, %arg2[%c6] : memref<24xf32, #tpu.memory_space<smem>>
    %c7 = arith.constant 7 : index
    %41 = memref.load %arg2[%c7] : memref<24xf32, #tpu.memory_space<smem>>
    memref.store %36, %arg2[%c7] : memref<24xf32, #tpu.memory_space<smem>>
    %c8 = arith.constant 8 : index
    %42 = memref.load %arg2[%c8] : memref<24xf32, #tpu.memory_space<smem>>
    memref.store %39, %arg2[%c8] : memref<24xf32, #tpu.memory_space<smem>>
    %cst_15 = arith.constant 0.00999999977 : f32
    %43 = arith.mulf %cst_15, %32 : f32
    %44 = arith.mulf %7, %32 : f32
    %45 = arith.mulf %6, %36 : f32
    %46 = arith.addf %44, %45 : f32
    %cst_16 = arith.constant 9.900000e-01 : f32
    %47 = arith.mulf %cst_16, %36 : f32
    %48 = arith.subf %1, %39 : f32
    %49 = arith.mulf %43, %48 : f32
    %50 = arith.addf %47, %49 : f32
    %51 = arith.mulf %9, %39 : f32
    %52 = arith.mulf %43, %36 : f32
    %53 = arith.addf %51, %52 : f32
    %c9 = arith.constant 9 : index
    %54 = memref.load %arg2[%c9] : memref<24xf32, #tpu.memory_space<smem>>
    memref.store %46, %arg2[%c9] : memref<24xf32, #tpu.memory_space<smem>>
    %c10 = arith.constant 10 : index
    %55 = memref.load %arg2[%c10] : memref<24xf32, #tpu.memory_space<smem>>
    memref.store %50, %arg2[%c10] : memref<24xf32, #tpu.memory_space<smem>>
    %c11 = arith.constant 11 : index
    %56 = memref.load %arg2[%c11] : memref<24xf32, #tpu.memory_space<smem>>
    memref.store %53, %arg2[%c11] : memref<24xf32, #tpu.memory_space<smem>>
    %cst_17 = arith.constant 0.00999999977 : f32
    %57 = arith.mulf %cst_17, %46 : f32
    %58 = arith.mulf %7, %46 : f32
    %59 = arith.mulf %6, %50 : f32
    %60 = arith.addf %58, %59 : f32
    %cst_18 = arith.constant 9.900000e-01 : f32
    %61 = arith.mulf %cst_18, %50 : f32
    %62 = arith.subf %1, %53 : f32
    %63 = arith.mulf %57, %62 : f32
    %64 = arith.addf %61, %63 : f32
    %65 = arith.mulf %9, %53 : f32
    %66 = arith.mulf %57, %50 : f32
    %67 = arith.addf %65, %66 : f32
    %c12 = arith.constant 12 : index
    %68 = memref.load %arg2[%c12] : memref<24xf32, #tpu.memory_space<smem>>
    memref.store %60, %arg2[%c12] : memref<24xf32, #tpu.memory_space<smem>>
    %c13 = arith.constant 13 : index
    %69 = memref.load %arg2[%c13] : memref<24xf32, #tpu.memory_space<smem>>
    memref.store %64, %arg2[%c13] : memref<24xf32, #tpu.memory_space<smem>>
    %c14 = arith.constant 14 : index
    %70 = memref.load %arg2[%c14] : memref<24xf32, #tpu.memory_space<smem>>
    memref.store %67, %arg2[%c14] : memref<24xf32, #tpu.memory_space<smem>>
    %cst_19 = arith.constant 0.00999999977 : f32
    %71 = arith.mulf %cst_19, %60 : f32
    %72 = arith.mulf %7, %60 : f32
    %73 = arith.mulf %6, %64 : f32
    %74 = arith.addf %72, %73 : f32
    %cst_20 = arith.constant 9.900000e-01 : f32
    %75 = arith.mulf %cst_20, %64 : f32
    %76 = arith.subf %1, %67 : f32
    %77 = arith.mulf %71, %76 : f32
    %78 = arith.addf %75, %77 : f32
    %79 = arith.mulf %9, %67 : f32
    %80 = arith.mulf %71, %64 : f32
    %81 = arith.addf %79, %80 : f32
    %c15 = arith.constant 15 : index
    %82 = memref.load %arg2[%c15] : memref<24xf32, #tpu.memory_space<smem>>
    memref.store %74, %arg2[%c15] : memref<24xf32, #tpu.memory_space<smem>>
    %c16 = arith.constant 16 : index
    %83 = memref.load %arg2[%c16] : memref<24xf32, #tpu.memory_space<smem>>
    memref.store %78, %arg2[%c16] : memref<24xf32, #tpu.memory_space<smem>>
    %c17 = arith.constant 17 : index
    %84 = memref.load %arg2[%c17] : memref<24xf32, #tpu.memory_space<smem>>
    memref.store %81, %arg2[%c17] : memref<24xf32, #tpu.memory_space<smem>>
    %cst_21 = arith.constant 0.00999999977 : f32
    %85 = arith.mulf %cst_21, %74 : f32
    %86 = arith.mulf %7, %74 : f32
    %87 = arith.mulf %6, %78 : f32
    %88 = arith.addf %86, %87 : f32
    %cst_22 = arith.constant 9.900000e-01 : f32
    %89 = arith.mulf %cst_22, %78 : f32
    %90 = arith.subf %1, %81 : f32
    %91 = arith.mulf %85, %90 : f32
    %92 = arith.addf %89, %91 : f32
    %93 = arith.mulf %9, %81 : f32
    %94 = arith.mulf %85, %78 : f32
    %95 = arith.addf %93, %94 : f32
    %c18 = arith.constant 18 : index
    %96 = memref.load %arg2[%c18] : memref<24xf32, #tpu.memory_space<smem>>
    memref.store %88, %arg2[%c18] : memref<24xf32, #tpu.memory_space<smem>>
    %c19 = arith.constant 19 : index
    %97 = memref.load %arg2[%c19] : memref<24xf32, #tpu.memory_space<smem>>
    memref.store %92, %arg2[%c19] : memref<24xf32, #tpu.memory_space<smem>>
    %c20 = arith.constant 20 : index
    %98 = memref.load %arg2[%c20] : memref<24xf32, #tpu.memory_space<smem>>
    memref.store %95, %arg2[%c20] : memref<24xf32, #tpu.memory_space<smem>>
    %cst_23 = arith.constant 0.00999999977 : f32
    %99 = arith.mulf %cst_23, %88 : f32
    %100 = arith.mulf %7, %88 : f32
    %101 = arith.mulf %6, %92 : f32
    %102 = arith.addf %100, %101 : f32
    %cst_24 = arith.constant 9.900000e-01 : f32
    %103 = arith.mulf %cst_24, %92 : f32
    %104 = arith.subf %1, %95 : f32
    %105 = arith.mulf %99, %104 : f32
    %106 = arith.addf %103, %105 : f32
    %107 = arith.mulf %9, %95 : f32
    %108 = arith.mulf %99, %92 : f32
    %109 = arith.addf %107, %108 : f32
    %c21 = arith.constant 21 : index
    %110 = memref.load %arg2[%c21] : memref<24xf32, #tpu.memory_space<smem>>
    memref.store %102, %arg2[%c21] : memref<24xf32, #tpu.memory_space<smem>>
    %c22 = arith.constant 22 : index
    %111 = memref.load %arg2[%c22] : memref<24xf32, #tpu.memory_space<smem>>
    memref.store %106, %arg2[%c22] : memref<24xf32, #tpu.memory_space<smem>>
    %c23 = arith.constant 23 : index
    %112 = memref.load %arg2[%c23] : memref<24xf32, #tpu.memory_space<smem>>
    memref.store %109, %arg2[%c23] : memref<24xf32, #tpu.memory_space<smem>>
    return
  }
}

</mosaic_0001>

<llo_original>
// kernel: tpu_custom_call.1
$region0: #{tpu_custom_call.1}
  #allocation0 [shape = 'u32[]', space=smem, size = 0x4, offset = 0x4, fixed_abs, tag = 'smem constant byte address 0x4 - core index']
  #allocation1 [shape = 'u32[144,128]{1,0:T(1,128)}', space=vmem, size = 0x12000, scoped, tag = 'internal scratch']
  %s0 = inlined_call_operand.hbm [shape: f32[3], index: 0, kind: input, shape index: {}]
  %s1 = inlined_call_operand.vmem [shape: f32[3], index: 1, kind: input, shape index: {}]
  %s2 = inlined_call_operand.hbm [shape: f32[24], index: 2, kind: output, shape index: {}]
  %s3 = sld [smem:[#allocation0]]
  $region26: #{tpu_custom_call.1} parent=0
    _
  %s5 = ssub.s32 1, %s3
  %s6 = scalar_select 0, %s5, %s3
  $region1: #{tpu_custom_call.1} parent=0
    #allocation2 [shape = 'u8[512]{0}', space=smem, size = 0x200, scoped, tag = 'input window, operand 0, single buffered']
    #allocation3 [shape = 's32[1]{0}', space=sflag, size = 0x4, scoped, tag = 'scoped memory for tpu_custom_call.1']
    #allocation4 [shape = 's32[1]{0}', space=sflag, size = 0x4, scoped, tag = 'scoped memory for tpu_custom_call.1']
    #allocation5 [shape = 's32[1]{0}', space=sflag, size = 0x4, scoped, tag = 'scoped memory for tpu_custom_call.1']
    #allocation6 [shape = 'u8[512]{0}', space=smem, size = 0x200, scoped, tag = 'input window, operand 1, single buffered']
    #allocation7 [shape = 'u8[512]{0}', space=smem, size = 0x200, scoped, tag = 'output window, operand 0, single buffered']
    %7 = vsyncpa [#allocation3], 0
    %8 = vsyncpa [#allocation5], 0
    %9 = vsyncpa [#allocation4], 0
    // Predicated region
    $region2: #{tpu_custom_call.1} parent=1 // pred_check
      _
    $region3: #{tpu_custom_call.1} parent=1 // pred_check_branch
      %11 = sbr.rel (0) target = $region5
    $region4: #{tpu_custom_call.1} parent=1 // pred_region
      %s13 = ssub.s32 16, 16
      %14 = vsyncadd [#allocation3], %s13
      %17 = dma.hbm_to_smem %s0, 16, [#allocation2], [#allocation3]
    $region5: #{tpu_custom_call.1} parent=1 // pred_fallthru
      _
    // Predicated region
    $region6: #{tpu_custom_call.1} parent=1 // pred_check
      _
    $region7: #{tpu_custom_call.1} parent=1 // pred_check_branch
      %19 = sbr.rel (0) target = $region9
    $region8: #{tpu_custom_call.1} parent=1 // pred_region
      %s21 = ssub.s32 16, 16
      %22 = vsyncadd [#allocation5], %s21
      %s24 = sshll.u32 %s1, 4
      %s25 = int_to_ptr.vmem [resolvable:$true] %s24
      %27 = dma.vmem_to_smem %s25, 16, [#allocation6], [#allocation5]
    $region9: #{tpu_custom_call.1} parent=1 // pred_fallthru
      _
    // Predicated region
    $region10: #{tpu_custom_call.1} parent=1 // pred_check
      _
    $region11: #{tpu_custom_call.1} parent=1 // pred_check_branch
      %29 = sbr.rel (0) target = $region13
    $region12: #{tpu_custom_call.1} parent=1 // pred_region
      %30 = dma.done [#allocation3], 16
    $region13: #{tpu_custom_call.1} parent=1 // pred_fallthru
      _
    // Predicated region
    $region14: #{tpu_custom_call.1} parent=1 // pred_check
      _
    $region15: #{tpu_custom_call.1} parent=1 // pred_check_branch
      %32 = sbr.rel (0) target = $region17
    $region16: #{tpu_custom_call.1} parent=1 // pred_region
      %33 = dma.done [#allocation5], 16
    $region17: #{tpu_custom_call.1} parent=1 // pred_fallthru
      _
    %34 = sfence
    %s35 = sld [smem:[#allocation2]]
    %s36 = sld [smem:[#allocation2 + $0x1]]
    %s37 = sld [smem:[#allocation2 + $0x2]]
    %s38 = sld [smem:[#allocation6]]
    %s39 = sld [smem:[#allocation6 + $0x1]]
    %s40 = sld [smem:[#allocation6 + $0x2]]
    %s41 = smul.f32 %s35, 0.01
    %s42 = ssub.f32 1.0, %s41
    %s43 = smul.f32 %s37, 0.01
    %s44 = ssub.f32 1.0, %s43
    %s45 = scalar_lea.smem [#allocation7], 0
    %46 = sst [smem:[%s45]] %s38
    %s47 = scalar_lea.smem [#allocation7], 1
    %48 = sst [smem:[%s47]] %s39
    %s49 = scalar_lea.smem [#allocation7], 2
    %50 = sst [smem:[%s49]] %s40
    %s51 = smul.f32 %s38, 0.01
    %s52 = smul.f32 %s42, %s38
    %s53 = smul.f32 %s41, %s39
    %s54 = sadd.f32 %s52, %s53
    %s55 = smul.f32 %s39, 0.99
    %s56 = ssub.f32 %s36, %s40
    %s57 = smul.f32 %s51, %s56
    %s58 = sadd.f32 %s55, %s57
    %s59 = smul.f32 %s44, %s40
    %s60 = smul.f32 %s51, %s39
    %s61 = sadd.f32 %s59, %s60
    %s62 = scalar_lea.smem [#allocation7], 3
    %63 = sst [smem:[%s62]] %s54
    %s64 = scalar_lea.smem [#allocation7], 4
    %65 = sst [smem:[%s64]] %s58
    %s66 = scalar_lea.smem [#allocation7], 5
    %67 = sst [smem:[%s66]] %s61
    %s68 = smul.f32 %s54, 0.01
    %s69 = smul.f32 %s42, %s54
    %s70 = smul.f32 %s41, %s58
    %s71 = sadd.f32 %s69, %s70
    %s72 = smul.f32 %s58, 0.99
    %s73 = ssub.f32 %s36, %s61
    %s74 = smul.f32 %s68, %s73
    %s75 = sadd.f32 %s72, %s74
    %s76 = smul.f32 %s44, %s61
    %s77 = smul.f32 %s68, %s58
    %s78 = sadd.f32 %s76, %s77
    %s79 = scalar_lea.smem [#allocation7], 6
    %80 = sst [smem:[%s79]] %s71
    %s81 = scalar_lea.smem [#allocation7], 7
    %82 = sst [smem:[%s81]] %s75
    %s83 = scalar_lea.smem [#allocation7], 8
    %84 = sst [smem:[%s83]] %s78
    %s85 = smul.f32 %s71, 0.01
    %s86 = smul.f32 %s42, %s71
    %s87 = smul.f32 %s41, %s75
    %s88 = sadd.f32 %s86, %s87
    %s89 = smul.f32 %s75, 0.99
    %s90 = ssub.f32 %s36, %s78
    %s91 = smul.f32 %s85, %s90
    %s92 = sadd.f32 %s89, %s91
    %s93 = smul.f32 %s44, %s78
    %s94 = smul.f32 %s85, %s75
    %s95 = sadd.f32 %s93, %s94
    %s96 = scalar_lea.smem [#allocation7], 9
    %97 = sst [smem:[%s96]] %s88
    %s98 = scalar_lea.smem [#allocation7], 10
    %99 = sst [smem:[%s98]] %s92
    %s100 = scalar_lea.smem [#allocation7], 11
    %101 = sst [smem:[%s100]] %s95
    %s102 = smul.f32 %s88, 0.01
    %s103 = smul.f32 %s42, %s88
    %s104 = smul.f32 %s41, %s92
    %s105 = sadd.f32 %s103, %s104
    %s106 = smul.f32 %s92, 0.99
    %s107 = ssub.f32 %s36, %s95
    %s108 = smul.f32 %s102, %s107
    %s109 = sadd.f32 %s106, %s108
    %s110 = smul.f32 %s44, %s95
    %s111 = smul.f32 %s102, %s92
    %s112 = sadd.f32 %s110, %s111
    %s113 = scalar_lea.smem [#allocation7], 12
    %114 = sst [smem:[%s113]] %s105
    %s115 = scalar_lea.smem [#allocation7], 13
    %116 = sst [smem:[%s115]] %s109
    %s117 = scalar_lea.smem [#allocation7], 14
    %118 = sst [smem:[%s117]] %s112
    %s119 = smul.f32 %s105, 0.01
    %s120 = smul.f32 %s42, %s105
    %s121 = smul.f32 %s41, %s109
    %s122 = sadd.f32 %s120, %s121
    %s123 = smul.f32 %s109, 0.99
    %s124 = ssub.f32 %s36, %s112
    %s125 = smul.f32 %s119, %s124
    %s126 = sadd.f32 %s123, %s125
    %s127 = smul.f32 %s44, %s112
    %s128 = smul.f32 %s119, %s109
    %s129 = sadd.f32 %s127, %s128
    %s130 = scalar_lea.smem [#allocation7], 15
    %131 = sst [smem:[%s130]] %s122
    %s132 = scalar_lea.smem [#allocation7], 16
    %133 = sst [smem:[%s132]] %s126
    %s134 = scalar_lea.smem [#allocation7], 17
    %135 = sst [smem:[%s134]] %s129
    %s136 = smul.f32 %s122, 0.01
    %s137 = smul.f32 %s42, %s122
    %s138 = smul.f32 %s41, %s126
    %s139 = sadd.f32 %s137, %s138
    %s140 = smul.f32 %s126, 0.99
    %s141 = ssub.f32 %s36, %s129
    %s142 = smul.f32 %s136, %s141
    %s143 = sadd.f32 %s140, %s142
    %s144 = smul.f32 %s44, %s129
    %s145 = smul.f32 %s136, %s126
    %s146 = sadd.f32 %s144, %s145
    %s147 = scalar_lea.smem [#allocation7], 18
    %148 = sst [smem:[%s147]] %s139
    %s149 = scalar_lea.smem [#allocation7], 19
    %150 = sst [smem:[%s149]] %s143
    %s151 = scalar_lea.smem [#allocation7], 20
    %152 = sst [smem:[%s151]] %s146
    %s153 = smul.f32 %s139, 0.01
    %s154 = smul.f32 %s42, %s139
    %s155 = smul.f32 %s41, %s143
    %s156 = sadd.f32 %s154, %s155
    %s157 = smul.f32 %s143, 0.99
    %s158 = ssub.f32 %s36, %s146
    %s159 = smul.f32 %s153, %s158
    %s160 = sadd.f32 %s157, %s159
    %s161 = smul.f32 %s44, %s146
    %s162 = smul.f32 %s153, %s143
    %s163 = sadd.f32 %s161, %s162
    %s164 = scalar_lea.smem [#allocation7], 21
    %165 = sst [smem:[%s164]] %s156
    %s166 = scalar_lea.smem [#allocation7], 22
    %167 = sst [smem:[%s166]] %s160
    %s168 = scalar_lea.smem [#allocation7], 23
    %169 = sst [smem:[%s168]] %s163
    // Predicated region
    $region18: #{tpu_custom_call.1} parent=1 // pred_check
      _
    $region19: #{tpu_custom_call.1} parent=1 // pred_check_branch
      %171 = sbr.rel (0) target = $region21
    $region20: #{tpu_custom_call.1} parent=1 // pred_region
      %s173 = ssub.s32 16, 16
      %174 = vsyncadd [#allocation4], %s173
      %177 = dma.smem_to_hbm [#allocation7], 16, %s2, [#allocation4]
    $region21: #{tpu_custom_call.1} parent=1 // pred_fallthru
      _
    // Predicated region
    $region22: #{tpu_custom_call.1} parent=1 // pred_check
      _
    $region23: #{tpu_custom_call.1} parent=1 // pred_check_branch
      %179 = sbr.rel (0) target = $region25
    $region24: #{tpu_custom_call.1} parent=1 // pred_region
      %180 = dma.done [#allocation4], 16
    $region25: #{tpu_custom_call.1} parent=1 // pred_fallthru
      _
    %181 = sfence
    %182 = vsyncpa [#allocation3], 1
    %183 = vsyncpa [#allocation4], 1
    %184 = vsyncpa [#allocation5], 1

</llo_original>
